<compile_context>
chip_gen: v7x
topology: tpu7x:2x2x1
jax: 0.10.0
libtpu: 0.0.40
codegen_flags: <defaults>
</compile_context>

<pallas_src>
import functools

import jax
import jax.numpy as jnp
from jax.experimental import pallas as pl
from jax.experimental.pallas import tpu as pltpu

_LANE = 128
_SUBLANE = 8


def _round_up(n, m):
    return ((n + m - 1) // m) * m


def _dnn_kernel(x_ref, w1_ref, b1_ref, w2_ref, b2_ref, w3_ref, b3_ref, out_ref):
    # x arrives as raw f32 (TB, input_size); cast to the MXU compute dtype
    # in-kernel so the wrapper never materialises a padded bf16 copy in HBM.
    x = x_ref[...].astype(w1_ref.dtype)
    # fc1: Linear + ReLU  (bf16 operands on the MXU, f32 accumulation)
    h1 = jnp.dot(x, w1_ref[...], preferred_element_type=jnp.float32)
    h1 = jnp.maximum(h1 + b1_ref[...], 0.0)
    # fc2: Linear + ReLU
    h2 = jnp.dot(h1.astype(w2_ref.dtype), w2_ref[...],
                 preferred_element_type=jnp.float32)
    h2 = jnp.maximum(h2 + b2_ref[...], 0.0)
    # fc3: Linear (forward() returns raw logits)
    h3 = jnp.dot(h2.astype(w3_ref.dtype), w3_ref[...],
                 preferred_element_type=jnp.float32)
    out_ref[...] = (h3 + b3_ref[...]).astype(out_ref.dtype)


def prepare_params(w1, b1, w2, b2, w3, b3, *, compute_dtype=jnp.bfloat16):
    """One-time parameter prep: transpose to (in, out), pad the output
    (class) dimension to a lane-dense width, cast to the MXU compute dtype.
    PyTorch Linear weights are (out_features, in_features)."""
    in_features = w1.shape[1]
    hidden2 = w2.shape[0]
    num_classes = w3.shape[0]
    nc_pad = _round_up(num_classes, _LANE)

    # fc1 weight: keep K = in_features (x is fed unpadded; K<128 is fine —
    # this kernel is memory-bound, not MXU-bound).
    w1_t = w1.T.astype(compute_dtype)
    # fc2 weight: hidden dims are already MXU-friendly.
    w2_t = w2.T.astype(compute_dtype)
    # fc3 weight: zero-pad the output columns to a lane-dense width.
    w3_t = jnp.zeros((hidden2, nc_pad), compute_dtype)
    w3_t = w3_t.at[:, :num_classes].set(w3.T.astype(compute_dtype))

    # Biases as (1, out) f32 rows; padded classes get bias 0 (sliced off later).
    b1_r = b1[None, :].astype(jnp.float32)
    b2_r = b2[None, :].astype(jnp.float32)
    b3_r = jnp.zeros((1, nc_pad), jnp.float32)
    b3_r = b3_r.at[:, :num_classes].set(b3.astype(jnp.float32))

    params = (w1_t, b1_r, w2_t, b2_r, w3_t, b3_r)
    meta = dict(in_features=in_features, num_classes=num_classes)
    return params, meta


@functools.partial(jax.jit, static_argnames=("num_classes", "block_b", "out_dtype"))
def dnn_forward(x, params, *, num_classes, block_b=1024, out_dtype=jnp.float32):
    """x: (B, input_size) f32.  params: output of prepare_params."""
    w1_t, b1_r, w2_t, b2_r, w3_t, b3_r = params
    cd = w1_t.dtype

    B, in_features = x.shape
    hidden1 = w1_t.shape[1]
    hidden2 = w2_t.shape[1]
    nc_pad = w3_t.shape[1]

    # --- Tiny-batch fast path: fixed pallas_call / pad / slice overheads
    # dominate at B <= one sublane tile; let XLA fuse the matmul chain.
    if B <= _SUBLANE:
        h1 = jnp.maximum(
            jnp.dot(x.astype(cd), w1_t, preferred_element_type=jnp.float32) + b1_r, 0.0)
        h2 = jnp.maximum(
            jnp.dot(h1.astype(cd), w2_t, preferred_element_type=jnp.float32) + b2_r, 0.0)
        h3 = jnp.dot(h2.astype(cd), w3_t, preferred_element_type=jnp.float32) + b3_r
        return h3[:, :num_classes].astype(out_dtype)

    # --- Batch tiling: as large as possible (<= block_b, multiple of 8
    # sublanes), but keep >= 2 grid steps so v7x's second TensorCore gets
    # work (no cost on single-TC v5e/v6e).
    B_pad = _round_up(B, _SUBLANE)
    TB = min(block_b, B_pad)
    if B_pad // TB < 2 and B_pad >= 2 * _SUBLANE:
        TB = _round_up(B_pad // 2, _SUBLANE)
    B_pad = _round_up(B, TB)
    grid = (B_pad // TB,)

    # Only pad batch rows when B doesn't tile evenly (row-only zero pad;
    # no dtype-converting copy — the f32->bf16 cast happens in-kernel).
    if B_pad != B:
        x_in = jnp.zeros((B_pad, in_features), x.dtype).at[:B, :].set(x)
    else:
        x_in = x

    # Weights/biases: constant block index -> VMEM-resident across the grid.
    resident = lambda a: pl.BlockSpec(a.shape, lambda i: (0,) * a.ndim)

    flops = 2 * B_pad * (in_features * hidden1 + hidden1 * hidden2 + hidden2 * nc_pad)
    bytes_accessed = (
        x_in.size * x_in.dtype.itemsize
        + B_pad * nc_pad * jnp.dtype(out_dtype).itemsize
        + sum(a.size * a.dtype.itemsize for a in params)
    )

    out = pl.pallas_call(
        _dnn_kernel,
        out_shape=jax.ShapeDtypeStruct((B_pad, nc_pad), out_dtype),
        grid=grid,
        in_specs=[
            # x tile: last dim == full array dim (legal), pipelined over batch.
            pl.BlockSpec((TB, in_features), lambda i: (i, 0)),
            resident(w1_t), resident(b1_r),
            resident(w2_t), resident(b2_r),
            resident(w3_t), resident(b3_r),
        ],
        out_specs=pl.BlockSpec((TB, nc_pad), lambda i: (i, 0)),
        compiler_params=pltpu.CompilerParams(
            dimension_semantics=("parallel",),
        ),
        cost_estimate=pl.CostEstimate(
            flops=flops, transcendentals=0, bytes_accessed=bytes_accessed
        ),
    )(x_in, w1_t, b1_r, w2_t, b2_r, w3_t, b3_r)

    # Strip batch padding and the zero-weight/zero-bias padded classes.
    # (Cheap relative to the kernel; a decode-time consumer such as argmax
    # could instead be fused into the kernel epilogue.)
    return out[:B, :num_classes]


def reference_forward(x, w1, b1, w2, b2, w3, b3):
    h = jnp.maximum(x @ w1.T + b1, 0.0)
    h = jnp.maximum(h @ w2.T + b2, 0.0)
    return h @ w3.T + b3


if __name__ == "__main__":
    # Small shapes consistent with the module's __init__ signature; batch is
    # large enough to exercise the multi-step pipelined Pallas path (grid=2).
    batch = 64
    input_size = 40        # e.g. MFCC feature dim
    hidden_size1 = 128
    hidden_size2 = 128
    num_classes = 32

    key = jax.random.PRNGKey(0)
    k = jax.random.split(key, 7)
    x = jax.random.normal(k[0], (batch, input_size), dtype=jnp.float32)
    # Deterministic synthetic parameters (PyTorch Linear shape convention).
    w1 = jax.random.normal(k[1], (hidden_size1, input_size), jnp.float32) * 0.05
    b1 = jax.random.normal(k[2], (hidden_size1,), jnp.float32) * 0.05
    w2 = jax.random.normal(k[3], (hidden_size2, hidden_size1), jnp.float32) * 0.05
    b2 = jax.random.normal(k[4], (hidden_size2,), jnp.float32) * 0.05
    w3 = jax.random.normal(k[5], (num_classes, hidden_size2), jnp.float32) * 0.05
    b3 = jax.random.normal(k[6], (num_classes,), jnp.float32) * 0.05

    # One-time parameter prep (transpose / pad / cast), hoisted out of the
    # per-call path as in an inference hot loop.
    params, meta = prepare_params(w1, b1, w2, b2, w3, b3)
    params = jax.tree_util.tree_map(jax.block_until_ready, params)

    out = dnn_forward(x, params, num_classes=meta["num_classes"])
    out = jax.block_until_ready(out)

    ref = reference_forward(x, w1, b1, w2, b2, w3, b3)
    assert out.shape == (batch, num_classes)
    # bf16 MXU operands / bf16 inter-layer activations with f32 accumulation
    # -> relaxed tolerance versus the f32 reference.
    assert jnp.allclose(out, ref, atol=3e-2, rtol=3e-2), "mismatch vs reference"

    print("KERNEL_OK")
</pallas_src>

<mosaic_0001>
module attributes {stable_mosaic.version = 11 : i64} {
  func.func @_dnn_kernel(%arg0: i32, %arg1: memref<32x40xf32, #tpu.memory_space<vmem>>, %arg2: memref<40x128xbf16, #tpu.memory_space<vmem>>, %arg3: memref<1x128xf32, #tpu.memory_space<vmem>>, %arg4: memref<128x128xbf16, #tpu.memory_space<vmem>>, %arg5: memref<1x128xf32, #tpu.memory_space<vmem>>, %arg6: memref<128x128xbf16, #tpu.memory_space<vmem>>, %arg7: memref<1x128xf32, #tpu.memory_space<vmem>>, %arg8: memref<32x128xf32, #tpu.memory_space<vmem>>) attributes {dimension_semantics = [#tpu.dimension_semantics<parallel>], iteration_bounds = array<i64: 2>, scalar_prefetch = 0 : i64, scratch_operands = 0 : i64, tpu.core_type = #tpu.core_type<tc>, window_params = [{transform_indices = @transform_0, window_bounds = array<i64: 32, 40>}, {pipeline_mode = #tpu.pipeline_mode<synchronous>, transform_indices = @transform_1, window_bounds = array<i64: 40, 128>}, {pipeline_mode = #tpu.pipeline_mode<synchronous>, transform_indices = @transform_2, window_bounds = array<i64: 1, 128>}, {pipeline_mode = #tpu.pipeline_mode<synchronous>, transform_indices = @transform_3, window_bounds = array<i64: 128, 128>}, {pipeline_mode = #tpu.pipeline_mode<synchronous>, transform_indices = @transform_4, window_bounds = array<i64: 1, 128>}, {pipeline_mode = #tpu.pipeline_mode<synchronous>, transform_indices = @transform_5, window_bounds = array<i64: 128, 128>}, {pipeline_mode = #tpu.pipeline_mode<synchronous>, transform_indices = @transform_6, window_bounds = array<i64: 1, 128>}, {transform_indices = @transform_7, window_bounds = array<i64: 32, 128>}]} {
    %c0 = arith.constant 0 : index
    %c0_0 = arith.constant 0 : index
    %0 = vector.load %arg1[%c0, %c0_0] : memref<32x40xf32, #tpu.memory_space<vmem>>, vector<32x40xf32>
    %1 = arith.truncf %0 : vector<32x40xf32> to vector<32x40xbf16>
    %c0_1 = arith.constant 0 : index
    %c0_2 = arith.constant 0 : index
    %2 = vector.load %arg2[%c0_1, %c0_2] : memref<40x128xbf16, #tpu.memory_space<vmem>>, vector<40x128xbf16>
    %cst = arith.constant dense<0.000000e+00> : vector<32x128xf32>
    %3 = tpu.matmul %1, %2, %cst {dimension_numbers = #tpu.dot_dimension_numbers<[1], [0], [0], [1], [0, 0, 1, 1], [], []>} : vector<32x40xbf16>, vector<40x128xbf16>, vector<32x128xf32> -> vector<32x128xf32>
    %c0_3 = arith.constant 0 : index
    %c0_4 = arith.constant 0 : index
    %4 = vector.load %arg3[%c0_3, %c0_4] : memref<1x128xf32, #tpu.memory_space<vmem>>, vector<1x128xf32>
    %5 = vector.broadcast %4 : vector<1x128xf32> to vector<32x128xf32>
    %6 = arith.addf %3, %5 : vector<32x128xf32>
    %cst_5 = arith.constant 0.000000e+00 : f32
    %7 = vector.broadcast %cst_5 : f32 to vector<32x128xf32>
    %8 = arith.maximumf %6, %7 : vector<32x128xf32>
    %9 = arith.truncf %8 : vector<32x128xf32> to vector<32x128xbf16>
    %c0_6 = arith.constant 0 : index
    %c0_7 = arith.constant 0 : index
    %10 = vector.load %arg4[%c0_6, %c0_7] : memref<128x128xbf16, #tpu.memory_space<vmem>>, vector<128x128xbf16>
    %cst_8 = arith.constant dense<0.000000e+00> : vector<32x128xf32>
    %11 = tpu.matmul %9, %10, %cst_8 {dimension_numbers = #tpu.dot_dimension_numbers<[1], [0], [0], [1], [0, 0, 1, 1], [], []>} : vector<32x128xbf16>, vector<128x128xbf16>, vector<32x128xf32> -> vector<32x128xf32>
    %c0_9 = arith.constant 0 : index
    %c0_10 = arith.constant 0 : index
    %12 = vector.load %arg5[%c0_9, %c0_10] : memref<1x128xf32, #tpu.memory_space<vmem>>, vector<1x128xf32>
    %13 = vector.broadcast %12 : vector<1x128xf32> to vector<32x128xf32>
    %14 = arith.addf %11, %13 : vector<32x128xf32>
    %cst_11 = arith.constant 0.000000e+00 : f32
    %15 = vector.broadcast %cst_11 : f32 to vector<32x128xf32>
    %16 = arith.maximumf %14, %15 : vector<32x128xf32>
    %17 = arith.truncf %16 : vector<32x128xf32> to vector<32x128xbf16>
    %c0_12 = arith.constant 0 : index
    %c0_13 = arith.constant 0 : index
    %18 = vector.load %arg6[%c0_12, %c0_13] : memref<128x128xbf16, #tpu.memory_space<vmem>>, vector<128x128xbf16>
    %cst_14 = arith.constant dense<0.000000e+00> : vector<32x128xf32>
    %19 = tpu.matmul %17, %18, %cst_14 {dimension_numbers = #tpu.dot_dimension_numbers<[1], [0], [0], [1], [0, 0, 1, 1], [], []>} : vector<32x128xbf16>, vector<128x128xbf16>, vector<32x128xf32> -> vector<32x128xf32>
    %c0_15 = arith.constant 0 : index
    %c0_16 = arith.constant 0 : index
    %20 = vector.load %arg7[%c0_15, %c0_16] : memref<1x128xf32, #tpu.memory_space<vmem>>, vector<1x128xf32>
    %21 = vector.broadcast %20 : vector<1x128xf32> to vector<32x128xf32>
    %22 = arith.addf %19, %21 : vector<32x128xf32>
    %c0_17 = arith.constant 0 : index
    %c0_18 = arith.constant 0 : index
    %23 = vector.load %arg8[%c0_17, %c0_18] : memref<32x128xf32, #tpu.memory_space<vmem>>, vector<32x128xf32>
    tpu.vector_store %arg8[%c0_17, %c0_18], %22 {strides = array<i32>} : memref<32x128xf32, #tpu.memory_space<vmem>>, vector<32x128xf32>,
    return
  }
  func.func @transform_0(%arg0: i32) -> (i32, i32) {
    %c0_i32 = arith.constant 0 : i32
    %c0_i32_0 = arith.constant 0 : i32
    return %arg0, %c0_i32 : i32, i32
  }
  func.func @transform_1(%arg0: i32) -> (i32, i32) {
    %c0_i32 = arith.constant 0 : i32
    %c0_i32_0 = arith.constant 0 : i32
    %c0_i32_1 = arith.constant 0 : i32
    return %c0_i32, %c0_i32_0 : i32, i32
  }
  func.func @transform_2(%arg0: i32) -> (i32, i32) {
    %c0_i32 = arith.constant 0 : i32
    %c0_i32_0 = arith.constant 0 : i32
    %c0_i32_1 = arith.constant 0 : i32
    return %c0_i32, %c0_i32_0 : i32, i32
  }
  func.func @transform_3(%arg0: i32) -> (i32, i32) {
    %c0_i32 = arith.constant 0 : i32
    %c0_i32_0 = arith.constant 0 : i32
    %c0_i32_1 = arith.constant 0 : i32
    return %c0_i32, %c0_i32_0 : i32, i32
  }
  func.func @transform_4(%arg0: i32) -> (i32, i32) {
    %c0_i32 = arith.constant 0 : i32
    %c0_i32_0 = arith.constant 0 : i32
    %c0_i32_1 = arith.constant 0 : i32
    return %c0_i32, %c0_i32_0 : i32, i32
  }
  func.func @transform_5(%arg0: i32) -> (i32, i32) {
    %c0_i32 = arith.constant 0 : i32
    %c0_i32_0 = arith.constant 0 : i32
    %c0_i32_1 = arith.constant 0 : i32
    return %c0_i32, %c0_i32_0 : i32, i32
  }
  func.func @transform_6(%arg0: i32) -> (i32, i32) {
    %c0_i32 = arith.constant 0 : i32
    %c0_i32_0 = arith.constant 0 : i32
    %c0_i32_1 = arith.constant 0 : i32
    return %c0_i32, %c0_i32_0 : i32, i32
  }
  func.func @transform_7(%arg0: i32) -> (i32, i32) {
    %c0_i32 = arith.constant 0 : i32
    %c0_i32_0 = arith.constant 0 : i32
    return %arg0, %c0_i32 : i32, i32
  }
}

</mosaic_0001>

<llo_original>
// kernel: dnn_forward.1
$region0: #{dnn_forward.1}
  #allocation0 [shape = 'u32[]', space=smem, size = 0x4, offset = 0x4, fixed_abs, tag = 'smem constant byte address 0x4 - core index']
  #allocation1 [shape = 'u32[144,128]{1,0:T(1,128)}', space=vmem, size = 0x12000, scoped, tag = 'internal scratch']
  %s0 = inlined_call_operand.vmem [shape: f32[64,40], index: 0, kind: input, shape index: {}]
  %s1 = inlined_call_operand.vmem [shape: bf16[40,128], index: 1, kind: input, shape index: {}]
  %s2 = inlined_call_operand.vmem [shape: f32[1,128], index: 2, kind: input, shape index: {}]
  %s3 = inlined_call_operand.vmem [shape: bf16[128,128], index: 3, kind: input, shape index: {}]
  %s4 = inlined_call_operand.vmem [shape: f32[1,128], index: 4, kind: input, shape index: {}]
  %s5 = inlined_call_operand.hbm [shape: bf16[128,128], index: 5, kind: input, shape index: {}]
  %s6 = inlined_call_operand.vmem [shape: f32[1,128], index: 6, kind: input, shape index: {}]
  %s7 = inlined_call_operand.vmem [shape: f32[64,128], index: 7, kind: output, shape index: {}]
  %s8 = sld [smem:[#allocation0]]
  $region65: #{dnn_forward.1} parent=0
    _
  %s10 = ssub.s32 1, %s8
  %s11 = scalar_select 0, %s10, %s8
  $region1: #{dnn_forward.1} parent=0
    #allocation2 [shape = 'u8[32768]{0}', space=vmem, size = 0x8000, scoped, tag = 'input window, operand 5, single buffered']
    #allocation3 [shape = 's32[2]{0}', space=sflag, size = 0x8, scoped, tag = 'scoped memory for dnn_forward.1']
    %12 = vsyncpa [#allocation3], 0
    loop: start=0, step=1, limit=4
    $region2: #{dnn_forward.1} parent=1 // loop_pre_header
      _
    $region3: #{dnn_forward.1} parent=1 // loop_header
      %s14 = sphi 0, %s18
      %p15 = scmp.ge.s32.totalorder %s14, 4
      %s24 = sphi 0, %s26
      %s27 = sphi 0, %s24
      %s28 = sphi 0, %s27
      %s44 = sphi 0, %s28
      %s48 = sphi 0, %s48
      %s50 = sphi 0, %s48
      %s51 = sphi 0, %s50
      %s65 = sphi 0, %s51
      %s69 = sphi 0, %s69
      %s71 = sphi 0, %s69
      %s72 = sphi 0, %s71
      %s86 = sphi 0, %s72
      %s90 = sphi 0, %s90
      %s92 = sphi 0, %s90
      %s93 = sphi 0, %s92
      %s107 = sphi 0, %s93
      %s111 = sphi 0, %s111
      %s113 = sphi 0, %s111
      %s114 = sphi 0, %s113
      %s128 = sphi 0, %s114
      %s132 = sphi 0, %s132
      %s134 = sphi 0, %s132
      %s135 = sphi 0, %s134
      %s149 = sphi 0, %s135
      %s153 = sphi 0, %s153
      %s155 = sphi 0, %s153
      %s156 = sphi 0, %s155
      %s170 = sphi 0, %s156
      %s176 = sphi 0, %s178
      %s179 = sphi 0, %s176
      %s180 = sphi 0, %s179
      %s196 = sphi 0, %s180
    $region4: #{dnn_forward.1} parent=1 // loop_header_branch
      %17 = sbr.rel (%p15) target = $region8
    $region5: #{dnn_forward.1} parent=1 // loop_body
      %s19 = ssub.s32 %s14, 1
      %s20 = ssub.s32 %s14, 2
      %s21 = sadd.s32 %s14, 1
      %s22 = ssub.s32 %s14, %s21
      %p23 = scmp.eq.s32.totalorder %s22, 0
      %s25 = sadd.s32 %s24, 1
      %s26 = scalar_select %p23, %s24, %s25
      %p29 = pneg %p23
      %p30 = scmp.eq.s32.totalorder %s14, 1
      %p31 = por %p29, %p30
      %p32 = scmp.ne.s32.totalorder %s24, %s27
      %p33 = scmp.eq.s32.totalorder %s14, 0
      %p34 = por %p32, %p33
      %p35 = scmp.ne.s32.totalorder %s24, %s27
      %p36 = scmp.eq.s32.totalorder %s19, 1
      %p37 = por %p35, %p36
      %p38 = scmp.ne.s32.totalorder %s27, %s28
      %p39 = scmp.eq.s32.totalorder %s19, 0
      %p40 = por %p38, %p39
      %p41 = scmp.ne.s32.totalorder %s27, %s28
      %p42 = scmp.eq.s32.totalorder %s20, 1
      %p43 = por %p41, %p42
      %p45 = scmp.ne.s32.totalorder %s28, %s44
      %p46 = scmp.eq.s32.totalorder %s20, 0
      %p47 = por %p45, %p46
      %s49 = sadd.s32 %s48, 1
      %p52 = scmp.eq.s32.totalorder %s14, 1
      %p53 = scmp.ne.s32.totalorder %s48, %s50
      %p54 = scmp.eq.s32.totalorder %s14, 0
      %p55 = por %p53, %p54
      %p56 = scmp.ne.s32.totalorder %s48, %s50
      %p57 = scmp.eq.s32.totalorder %s19, 1
      %p58 = por %p56, %p57
      %p59 = scmp.ne.s32.totalorder %s50, %s51
      %p60 = scmp.eq.s32.totalorder %s19, 0
      %p61 = por %p59, %p60
      %p62 = scmp.ne.s32.totalorder %s50, %s51
      %p63 = scmp.eq.s32.totalorder %s20, 1
      %p64 = por %p62, %p63
      %p66 = scmp.ne.s32.totalorder %s51, %s65
      %p67 = scmp.eq.s32.totalorder %s20, 0
      %p68 = por %p66, %p67
      %s70 = sadd.s32 %s69, 1
      %p73 = scmp.eq.s32.totalorder %s14, 1
      %p74 = scmp.ne.s32.totalorder %s69, %s71
      %p75 = scmp.eq.s32.totalorder %s14, 0
      %p76 = por %p74, %p75
      %p77 = scmp.ne.s32.totalorder %s69, %s71
      %p78 = scmp.eq.s32.totalorder %s19, 1
      %p79 = por %p77, %p78
      %p80 = scmp.ne.s32.totalorder %s71, %s72
      %p81 = scmp.eq.s32.totalorder %s19, 0
      %p82 = por %p80, %p81
      %p83 = scmp.ne.s32.totalorder %s71, %s72
      %p84 = scmp.eq.s32.totalorder %s20, 1
      %p85 = por %p83, %p84
      %p87 = scmp.ne.s32.totalorder %s72, %s86
      %p88 = scmp.eq.s32.totalorder %s20, 0
      %p89 = por %p87, %p88
      %s91 = sadd.s32 %s90, 1
      %p94 = scmp.eq.s32.totalorder %s14, 1
      %p95 = scmp.ne.s32.totalorder %s90, %s92
      %p96 = scmp.eq.s32.totalorder %s14, 0
      %p97 = por %p95, %p96
      %p98 = scmp.ne.s32.totalorder %s90, %s92
      %p99 = scmp.eq.s32.totalorder %s19, 1
      %p100 = por %p98, %p99
      %p101 = scmp.ne.s32.totalorder %s92, %s93
      %p102 = scmp.eq.s32.totalorder %s19, 0
      %p103 = por %p101, %p102
      %p104 = scmp.ne.s32.totalorder %s92, %s93
      %p105 = scmp.eq.s32.totalorder %s20, 1
      %p106 = por %p104, %p105
      %p108 = scmp.ne.s32.totalorder %s93, %s107
      %p109 = scmp.eq.s32.totalorder %s20, 0
      %p110 = por %p108, %p109
      %s112 = sadd.s32 %s111, 1
      %p115 = scmp.eq.s32.totalorder %s14, 1
      %p116 = scmp.ne.s32.totalorder %s111, %s113
      %p117 = scmp.eq.s32.totalorder %s14, 0
      %p118 = por %p116, %p117
      %p119 = scmp.ne.s32.totalorder %s111, %s113
      %p120 = scmp.eq.s32.totalorder %s19, 1
      %p121 = por %p119, %p120
      %p122 = scmp.ne.s32.totalorder %s113, %s114
      %p123 = scmp.eq.s32.totalorder %s19, 0
      %p124 = por %p122, %p123
      %p125 = scmp.ne.s32.totalorder %s113, %s114
      %p126 = scmp.eq.s32.totalorder %s20, 1
      %p127 = por %p125, %p126
      %p129 = scmp.ne.s32.totalorder %s114, %s128
      %p130 = scmp.eq.s32.totalorder %s20, 0
      %p131 = por %p129, %p130
      %s133 = sadd.s32 %s132, 1
      %p136 = scmp.eq.s32.totalorder %s14, 1
      %p137 = scmp.ne.s32.totalorder %s132, %s134
      %p138 = scmp.eq.s32.totalorder %s14, 0
      %p139 = por %p137, %p138
      %p140 = scmp.ne.s32.totalorder %s132, %s134
      %p141 = scmp.eq.s32.totalorder %s19, 1
      %p142 = por %p140, %p141
      %p143 = scmp.ne.s32.totalorder %s134, %s135
      %p144 = scmp.eq.s32.totalorder %s19, 0
      %p145 = por %p143, %p144
      %p146 = scmp.ne.s32.totalorder %s134, %s135
      %p147 = scmp.eq.s32.totalorder %s20, 1
      %p148 = por %p146, %p147
      %p150 = scmp.ne.s32.totalorder %s135, %s149
      %p151 = scmp.eq.s32.totalorder %s20, 0
      %p152 = por %p150, %p151
      %s154 = sadd.s32 %s153, 1
      %p157 = scmp.eq.s32.totalorder %s14, 1
      %p158 = scmp.ne.s32.totalorder %s153, %s155
      %p159 = scmp.eq.s32.totalorder %s14, 0
      %p160 = por %p158, %p159
      %p161 = scmp.ne.s32.totalorder %s153, %s155
      %p162 = scmp.eq.s32.totalorder %s19, 1
      %p163 = por %p161, %p162
      %p164 = scmp.ne.s32.totalorder %s155, %s156
      %p165 = scmp.eq.s32.totalorder %s19, 0
      %p166 = por %p164, %p165
      %p167 = scmp.ne.s32.totalorder %s155, %s156
      %p168 = scmp.eq.s32.totalorder %s20, 1
      %p169 = por %p167, %p168
      %p171 = scmp.ne.s32.totalorder %s156, %s170
      %p172 = scmp.eq.s32.totalorder %s20, 0
      %p173 = por %p171, %p172
      %s174 = ssub.s32 %s14, %s21
      %p175 = scmp.eq.s32.totalorder %s174, 0
      %s177 = sadd.s32 %s176, 1
      %s178 = scalar_select %p175, %s176, %s177
      %p181 = pneg %p175
      %p182 = scmp.eq.s32.totalorder %s14, 1
      %p183 = por %p181, %p182
      %p184 = scmp.ne.s32.totalorder %s176, %s179
      %p185 = scmp.eq.s32.totalorder %s14, 0
      %p186 = por %p184, %p185
      %p187 = scmp.ne.s32.totalorder %s176, %s179
      %p188 = scmp.eq.s32.totalorder %s19, 1
      %p189 = por %p187, %p188
      %p190 = scmp.ne.s32.totalorder %s179, %s180
      %p191 = scmp.eq.s32.totalorder %s19, 0
      %p192 = por %p190, %p191
      %p193 = scmp.ne.s32.totalorder %s179, %s180
      %p194 = scmp.eq.s32.totalorder %s20, 1
      %p195 = por %p193, %p194
      %p197 = scmp.ne.s32.totalorder %s180, %s196
      %p198 = scmp.eq.s32.totalorder %s20, 0
      %p199 = por %p197, %p198
      %p200 = scmp.le.s32.totalorder 1, %s14
      %p201 = scmp.lt.s32.totalorder %s14, 3
      %p202 = pnand %p200, %p201
      %p203 = pneg %p202
      // Predicated region
      $region9: #{dnn_forward.1} parent=5 // pred_check
        _
      $region10: #{dnn_forward.1} parent=5 // pred_check_branch
        %205 = sbr.rel (%p202) target = $region12
      $region11: #{dnn_forward.1} parent=5 // pred_region
        %s206 = ssub.s32 %s14, 1
        // Predicated region
        $region13: #{dnn_forward.1} parent=11 // pred_check
          %p207 = pneg %p61
        $region14: #{dnn_forward.1} parent=11 // pred_check_branch
          %209 = sbr.rel (%p207) target = $region16
        $region15: #{dnn_forward.1} parent=11 // pred_region
          _
        $region16: #{dnn_forward.1} parent=11 // pred_fallthru
          _
        // Predicated region
        $region17: #{dnn_forward.1} parent=11 // pred_check
          %p210 = pneg %p82
        $region18: #{dnn_forward.1} parent=11 // pred_check_branch
          %212 = sbr.rel (%p210) target = $region20
        $region19: #{dnn_forward.1} parent=11 // pred_region
          _
        $region20: #{dnn_forward.1} parent=11 // pred_fallthru
          _
        // Predicated region
        $region21: #{dnn_forward.1} parent=11 // pred_check
          %p213 = pneg %p103
        $region22: #{dnn_forward.1} parent=11 // pred_check_branch
          %215 = sbr.rel (%p213) target = $region24
        $region23: #{dnn_forward.1} parent=11 // pred_region
          _
        $region24: #{dnn_forward.1} parent=11 // pred_fallthru
          _
        // Predicated region
        $region25: #{dnn_forward.1} parent=11 // pred_check
          %p216 = pneg %p124
        $region26: #{dnn_forward.1} parent=11 // pred_check_branch
          %218 = sbr.rel (%p216) target = $region28
        $region27: #{dnn_forward.1} parent=11 // pred_region
          _
        $region28: #{dnn_forward.1} parent=11 // pred_fallthru
          _
        // Predicated region
        $region29: #{dnn_forward.1} parent=11 // pred_check
          %p219 = pneg %p145
        $region30: #{dnn_forward.1} parent=11 // pred_check_branch
          %221 = sbr.rel (%p219) target = $region32
        $region31: #{dnn_forward.1} parent=11 // pred_region
          %s223 = ssub.s32 1024, 1024
          %224 = vsyncadd [#allocation3], %s223
          %s225 = sshll.u32 [#allocation2], 4
          %s226 = int_to_ptr.vmem [resolvable:$true] %s225
          %231 = dma.hbm_to_vmem [thread:$0]  %s5, 1024, %s226, [#allocation3], 64, 64, 4
        $region32: #{dnn_forward.1} parent=11 // pred_fallthru
          _
        // Predicated region
        $region33: #{dnn_forward.1} parent=11 // pred_check
          %p232 = pneg %p166
        $region34: #{dnn_forward.1} parent=11 // pred_check_branch
          %234 = sbr.rel (%p232) target = $region36
        $region35: #{dnn_forward.1} parent=11 // pred_region
          _
        $region36: #{dnn_forward.1} parent=11 // pred_fallthru
          _
      $region12: #{dnn_forward.1} parent=5 // pred_fallthru
        _
      %p235 = scmp.lt.s32.totalorder %s14, 2
      // Predicated region
      $region37: #{dnn_forward.1} parent=5 // pred_check
        %p236 = pneg %p235
      $region38: #{dnn_forward.1} parent=5 // pred_check_branch
        %238 = sbr.rel (%p236) target = $region40
      $region39: #{dnn_forward.1} parent=5 // pred_region
        // Predicated region
        $region41: #{dnn_forward.1} parent=39 // pred_check
          %p239 = pneg %p34
        $region42: #{dnn_forward.1} parent=39 // pred_check_branch
          %241 = sbr.rel (%p239) target = $region44
        $region43: #{dnn_forward.1} parent=39 // pred_region
          %s242 = smul.u32 4, %s14
          %p243 = scmp.lt.s32.totalorder %s242, 7
          %s244 = scalar_select %p243, %s242, 7
          %s245 = smul.addr %s244, 8
          %s246 = scalar_lea.vmem %s0, %s245
          %s247 = smul.u32 4, %s14
        $region44: #{dnn_forward.1} parent=39 // pred_fallthru
          _
      $region40: #{dnn_forward.1} parent=5 // pred_fallthru
        _
      %p248 = scmp.le.s32.totalorder 1, %s14
      %p249 = scmp.lt.s32.totalorder %s14, 3
      %p250 = pnand %p248, %p249
      %p251 = pneg %p250
      // Predicated region
      $region45: #{dnn_forward.1} parent=5 // pred_check
        _
      $region46: #{dnn_forward.1} parent=5 // pred_check_branch
        %253 = sbr.rel (%p250) target = $region48
      $region47: #{dnn_forward.1} parent=5 // pred_region
        %s254 = ssub.s32 %s14, 1
        // Predicated region
        $region49: #{dnn_forward.1} parent=47 // pred_check
          %p255 = pneg %p145
        $region50: #{dnn_forward.1} parent=47 // pred_check_branch
          %257 = sbr.rel (%p255) target = $region52
        $region51: #{dnn_forward.1} parent=47 // pred_region
          %258 = dma.done [#allocation3], 1024
        $region52: #{dnn_forward.1} parent=47 // pred_fallthru
          _
        %s259 = smul.u32 4, %s19
        %p260 = scmp.lt.s32.totalorder %s259, 7
        %s261 = scalar_select %p260, %s259, 7
        %s262 = smul.addr %s261, 8
        %s263 = scalar_lea.vmem %s0, %s262
        %p264 = pneg %p40
        %p265 = pneg %p37
        %p266 = pneg %p61
        %p267 = pneg %p58
        %p268 = pneg %p82
        %p269 = pneg %p79
        %p270 = pneg %p103
        %p271 = pneg %p100
        %p272 = pneg %p124
        %p273 = pneg %p121
        %p274 = pneg %p145
        %p275 = pneg %p142
        %p276 = pneg %p166
        %p277 = pneg %p163
        %p278 = pneg %p192
        %p279 = pneg %p189
        %s280 = smul.u32 4, %s19
        %p281 = scmp.lt.s32.totalorder %s280, 7
        %s282 = scalar_select %p281, %s280, 7
        %s283 = smul.addr %s282, 8
        %s284 = scalar_lea.vmem %s7, %s283
        %s285 = smul.u32 4, %s19
        %p286 = scmp.lt.s32.totalorder %s285, 7
        %s287 = scalar_select %p286, %s285, 7
        %s288 = smul.addr %s287, 8
        %s289 = scalar_lea.vmem %s0, %s288
        %s290 = smul.u32 4, %s19
        %s291 = smul.u32 4, %s19
        %p292 = scmp.lt.s32.totalorder %s291, 7
        %s293 = scalar_select %p292, %s291, 7
        %s294 = smul.addr %s293, 8
        %s295 = scalar_lea.vmem %s7, %s294
        %s296 = smul.u32 4, %s19
        %v298 = vld [vmem:[%s289] sm:$0xff]
        %v299 = vld [vmem:[%s289 + $0x8] sm:$0xff]
        %v300 = vld [vmem:[%s289 + $0x10] sm:$0xff]
        %v301 = vld [vmem:[%s289 + $0x18] sm:$0xff]
        %v302 = vpack.c.bf16 %v299, %v298
        %v303 = vpack.c.bf16 %v301, %v300
        %v304 = vld [vmem:[%s1] sm:$0xf]
        %v305 = vld [vmem:[%s1 + $0x4] sm:$0xf]
        %v306 = vld [vmem:[%s1 + $0x8] sm:$0xf]
        %v307 = vld [vmem:[%s1 + $0xc] sm:$0xf]
        %v308 = vld [vmem:[%s1 + $0x10] sm:$0xf]
        %v309 = vld [vmem:[%s2] sm:$0x1]
        %v311 = vlaneseq
        %v312 = vshrl.u32 %v311, 7
        %v313 = vsub.s32 0, %v312
        %v314 = vrot.slane %v309, %v313
        %v321 = vunpack.c.l.b16 %v304
        %v322 = vunpack.c.l.b16 %v305
        %v323 = vunpack.c.l.b16 %v306
        %v324 = vunpack.c.l.b16 %v307
        %v325 = vunpack.c.l.b16 %v308
        %v326 = vpack.c.b16 %v322, %v321
        %v327 = vpack.c.b16 %v324, %v323
        %v328 = vpack.c.b16 %v325, %v325
        %vm331 = vcmask 326656
        %v333 = vsel %vm331, %v302, 0
        %v336 = vsel %vm331, %v303, 0
        %vm338 = vcmask 1043456
        %v340 = vsel %vm338, %v328, 0
        %342 = vmatprep.subr.bf16.mxu0 0
        %343 = vmatpush1.bf16.msra.mxu0 %v326
        %344 = vmatprep.subr.bf16.mxu0 0
        %345 = vmatpush1.bf16.msra.mxu0 %v327
        %346 = vmatprep.subr.bf16.mxu0 0
        %347 = vmatpush1.bf16.msra.mxu0 %v340
        %348 = vmatprep.subr.bf16.mxu0 0
        %349 = vmatpush1.bf16.msra.mxu0 0
        %350 = vmatprep.subr.bf16.mxu0 0
        %351 = vmatpush1.bf16.msra.mxu0 0
        %352 = vmatprep.subr.bf16.mxu0 0
        %353 = vmatpush1.bf16.msra.mxu0 0
        %354 = vmatprep.subr.bf16.mxu0 0
        %355 = vmatpush1.bf16.msra.mxu0 0
        %356 = vmatprep.subr.bf16.mxu0 0
        %357 = vmatpush1.bf16.msra.mxu0 0
        %358 = vmatprep.subr.bf16.mxu0 0
        %359 = vmatpush1.bf16.msra.mxu0 0
        %360 = vmatprep.subr.bf16.mxu0 0
        %361 = vmatpush1.bf16.msra.mxu0 0
        %362 = vmatprep.subr.bf16.mxu0 0
        %363 = vmatpush1.bf16.msra.mxu0 0
        %364 = vmatprep.subr.bf16.mxu0 0
        %365 = vmatpush1.bf16.msra.mxu0 0
        %366 = vmatprep.subr.bf16.mxu0 0
        %367 = vmatpush1.bf16.msra.mxu0 0
        %368 = vmatprep.subr.bf16.mxu0 0
        %369 = vmatpush1.bf16.msra.mxu0 0
        %370 = vmatprep.subr.bf16.mxu0 0
        %371 = vmatpush1.bf16.msra.mxu0 0
        %372 = vmatprep.subr.bf16.mxu0 0
        %373 = vmatpush1.bf16.msra.mxu0 0
        %374 = vmatprep.mubr.bf16.mxu0 0
        %375 = vmatmul.mubr.bf16.gmra.mrb[0].mxu0 %v333
        %v376 = vpop.f32.mrb[0].mxu0
        %v377 = vadd.f32 %v314, %v376
        %v378 = vpop.f32.mrb[0].mxu0
        %v379 = vpop.f32.mrb[0].mxu0
        %v380 = vadd.f32 %v314, %v379
        %v381 = vpop.f32.mrb[0].mxu0
        %382 = vmatprep.mubr.bf16.mxu0 0
        %383 = vmatmul.mubr.bf16.gmra.mrb[0].mxu0 %v336
        %v384 = vpop.f32.mrb[0].mxu0
        %v385 = vadd.f32 %v314, %v384
        %v386 = vpop.f32.mrb[0].mxu0
        %v387 = vpop.f32.mrb[0].mxu0
        %v388 = vadd.f32 %v314, %v387
        %v389 = vpop.f32.mrb[0].mxu0
        %390 = vdwg.mxu0
        %v391 = vmax.f32 %v377, 0.0
        %v392 = vmax.f32 %v380, 0.0
        %v393 = vmax.f32 %v385, 0.0
        %v394 = vmax.f32 %v388, 0.0
        %v395 = vpack.c.bf16 %v392, %v391
        %v396 = vpack.c.bf16 %v394, %v393
        %v397 = vld [vmem:[%s3] sm:$0xf]
        %v398 = vld [vmem:[%s3 + $0x4] sm:$0xf]
        %v399 = vld [vmem:[%s3 + $0x8] sm:$0xf]
        %v400 = vld [vmem:[%s3 + $0xc] sm:$0xf]
        %v401 = vld [vmem:[%s3 + $0x10] sm:$0xf]
        %v402 = vld [vmem:[%s3 + $0x14] sm:$0xf]
        %v403 = vld [vmem:[%s3 + $0x18] sm:$0xf]
        %v404 = vld [vmem:[%s3 + $0x1c] sm:$0xf]
        %v405 = vld [vmem:[%s3 + $0x20] sm:$0xf]
        %v406 = vld [vmem:[%s3 + $0x24] sm:$0xf]
        %v407 = vld [vmem:[%s3 + $0x28] sm:$0xf]
        %v408 = vld [vmem:[%s3 + $0x2c] sm:$0xf]
        %v409 = vld [vmem:[%s3 + $0x30] sm:$0xf]
        %v410 = vld [vmem:[%s3 + $0x34] sm:$0xf]
        %v411 = vld [vmem:[%s3 + $0x38] sm:$0xf]
        %v412 = vld [vmem:[%s3 + $0x3c] sm:$0xf]
        %v413 = vld [vmem:[%s4] sm:$0x1]
        %v415 = vlaneseq
        %v416 = vshrl.u32 %v415, 7
        %v417 = vsub.s32 0, %v416
        %v418 = vrot.slane %v413, %v417
        %v436 = vunpack.c.l.b16 %v397
        %v437 = vunpack.c.l.b16 %v398
        %v438 = vunpack.c.l.b16 %v399
        %v439 = vunpack.c.l.b16 %v400
        %v440 = vunpack.c.l.b16 %v401
        %v441 = vunpack.c.l.b16 %v402
        %v442 = vunpack.c.l.b16 %v403
        %v443 = vunpack.c.l.b16 %v404
        %v444 = vunpack.c.l.b16 %v405
        %v445 = vunpack.c.l.b16 %v406
        %v446 = vunpack.c.l.b16 %v407
        %v447 = vunpack.c.l.b16 %v408
        %v448 = vunpack.c.l.b16 %v409
        %v449 = vunpack.c.l.b16 %v410
        %v450 = vunpack.c.l.b16 %v411
        %v451 = vunpack.c.l.b16 %v412
        %v452 = vpack.c.b16 %v437, %v436
        %v453 = vpack.c.b16 %v439, %v438
        %v454 = vpack.c.b16 %v441, %v440
        %v455 = vpack.c.b16 %v443, %v442
        %v456 = vpack.c.b16 %v445, %v444
        %v457 = vpack.c.b16 %v447, %v446
        %v458 = vpack.c.b16 %v449, %v448
        %v459 = vpack.c.b16 %v451, %v450
        %468 = vmatprep.subr.bf16.mxu0 0
        %469 = vmatpush1.bf16.msra.mxu0 %v452
        %470 = vmatprep.subr.bf16.mxu0 0
        %471 = vmatpush1.bf16.msra.mxu0 %v453
        %472 = vmatprep.subr.bf16.mxu0 0
        %473 = vmatpush1.bf16.msra.mxu0 %v454
        %474 = vmatprep.subr.bf16.mxu0 0
        %475 = vmatpush1.bf16.msra.mxu0 %v455
        %476 = vmatprep.subr.bf16.mxu0 0
        %477 = vmatpush1.bf16.msra.mxu0 %v456
        %478 = vmatprep.subr.bf16.mxu0 0
        %479 = vmatpush1.bf16.msra.mxu0 %v457
        %480 = vmatprep.subr.bf16.mxu0 0
        %481 = vmatpush1.bf16.msra.mxu0 %v458
        %482 = vmatprep.subr.bf16.mxu0 0
        %483 = vmatpush1.bf16.msra.mxu0 %v459
        %484 = vmatprep.subr.bf16.mxu0 0
        %485 = vmatpush1.bf16.msra.mxu0 0
        %486 = vmatprep.subr.bf16.mxu0 0
        %487 = vmatpush1.bf16.msra.mxu0 0
        %488 = vmatprep.subr.bf16.mxu0 0
        %489 = vmatpush1.bf16.msra.mxu0 0
        %490 = vmatprep.subr.bf16.mxu0 0
        %491 = vmatpush1.bf16.msra.mxu0 0
        %492 = vmatprep.subr.bf16.mxu0 0
        %493 = vmatpush1.bf16.msra.mxu0 0
        %494 = vmatprep.subr.bf16.mxu0 0
        %495 = vmatpush1.bf16.msra.mxu0 0
        %496 = vmatprep.subr.bf16.mxu0 0
        %497 = vmatpush1.bf16.msra.mxu0 0
        %498 = vmatprep.subr.bf16.mxu0 0
        %499 = vmatpush1.bf16.msra.mxu0 0
        %500 = vmatprep.mubr.bf16.mxu0 0
        %501 = vmatmul.mubr.bf16.gmra.mrb[0].mxu0 %v395
        %v502 = vpop.f32.mrb[0].mxu0
        %v503 = vadd.f32 %v418, %v502
        %v504 = vpop.f32.mrb[0].mxu0
        %v505 = vpop.f32.mrb[0].mxu0
        %v506 = vadd.f32 %v418, %v505
        %v507 = vpop.f32.mrb[0].mxu0
        %508 = vmatprep.mubr.bf16.mxu0 0
        %509 = vmatmul.mubr.bf16.gmra.mrb[0].mxu0 %v396
        %v510 = vpop.f32.mrb[0].mxu0
        %v511 = vadd.f32 %v418, %v510
        %v512 = vpop.f32.mrb[0].mxu0
        %v513 = vpop.f32.mrb[0].mxu0
        %v514 = vadd.f32 %v418, %v513
        %v515 = vpop.f32.mrb[0].mxu0
        %516 = vdwg.mxu0
        %v517 = vmax.f32 %v503, 0.0
        %v518 = vmax.f32 %v506, 0.0
        %v519 = vmax.f32 %v511, 0.0
        %v520 = vmax.f32 %v514, 0.0
        %v521 = vpack.c.bf16 %v518, %v517
        %v522 = vpack.c.bf16 %v520, %v519
        %v523 = vld [vmem:[#allocation2] sm:$0xf]
        %v524 = vld [vmem:[#allocation2 + $0x4] sm:$0xf]
        %v525 = vld [vmem:[#allocation2 + $0x8] sm:$0xf]
        %v526 = vld [vmem:[#allocation2 + $0xc] sm:$0xf]
        %v527 = vld [vmem:[#allocation2 + $0x10] sm:$0xf]
        %v528 = vld [vmem:[#allocation2 + $0x14] sm:$0xf]
        %v529 = vld [vmem:[#allocation2 + $0x18] sm:$0xf]
        %v530 = vld [vmem:[#allocation2 + $0x1c] sm:$0xf]
        %v531 = vld [vmem:[#allocation2 + $0x20] sm:$0xf]
        %v532 = vld [vmem:[#allocation2 + $0x24] sm:$0xf]
        %v533 = vld [vmem:[#allocation2 + $0x28] sm:$0xf]
        %v534 = vld [vmem:[#allocation2 + $0x2c] sm:$0xf]
        %v535 = vld [vmem:[#allocation2 + $0x30] sm:$0xf]
        %v536 = vld [vmem:[#allocation2 + $0x34] sm:$0xf]
        %v537 = vld [vmem:[#allocation2 + $0x38] sm:$0xf]
        %v538 = vld [vmem:[#allocation2 + $0x3c] sm:$0xf]
        %v539 = vld [vmem:[%s6] sm:$0x1]
        %v541 = vlaneseq
        %v542 = vshrl.u32 %v541, 7
        %v543 = vsub.s32 0, %v542
        %v544 = vrot.slane %v539, %v543
        %v562 = vunpack.c.l.b16 %v523
        %v563 = vunpack.c.l.b16 %v524
        %v564 = vunpack.c.l.b16 %v525
        %v565 = vunpack.c.l.b16 %v526
        %v566 = vunpack.c.l.b16 %v527
        %v567 = vunpack.c.l.b16 %v528
        %v568 = vunpack.c.l.b16 %v529
        %v569 = vunpack.c.l.b16 %v530
        %v570 = vunpack.c.l.b16 %v531
        %v571 = vunpack.c.l.b16 %v532
        %v572 = vunpack.c.l.b16 %v533
        %v573 = vunpack.c.l.b16 %v534
        %v574 = vunpack.c.l.b16 %v535
        %v575 = vunpack.c.l.b16 %v536
        %v576 = vunpack.c.l.b16 %v537
        %v577 = vunpack.c.l.b16 %v538
        %v578 = vpack.c.b16 %v563, %v562
        %v579 = vpack.c.b16 %v565, %v564
        %v580 = vpack.c.b16 %v567, %v566
        %v581 = vpack.c.b16 %v569, %v568
        %v582 = vpack.c.b16 %v571, %v570
        %v583 = vpack.c.b16 %v573, %v572
        %v584 = vpack.c.b16 %v575, %v574
        %v585 = vpack.c.b16 %v577, %v576
        %594 = vmatprep.subr.bf16.mxu0 0
        %595 = vmatpush1.bf16.msra.mxu0 %v578
        %596 = vmatprep.subr.bf16.mxu0 0
        %597 = vmatpush1.bf16.msra.mxu0 %v579
        %598 = vmatprep.subr.bf16.mxu0 0
        %599 = vmatpush1.bf16.msra.mxu0 %v580
        %600 = vmatprep.subr.bf16.mxu0 0
        %601 = vmatpush1.bf16.msra.mxu0 %v581
        %602 = vmatprep.subr.bf16.mxu0 0
        %603 = vmatpush1.bf16.msra.mxu0 %v582
        %604 = vmatprep.subr.bf16.mxu0 0
        %605 = vmatpush1.bf16.msra.mxu0 %v583
        %606 = vmatprep.subr.bf16.mxu0 0
        %607 = vmatpush1.bf16.msra.mxu0 %v584
        %608 = vmatprep.subr.bf16.mxu0 0
        %609 = vmatpush1.bf16.msra.mxu0 %v585
        %610 = vmatprep.subr.bf16.mxu0 0
        %611 = vmatpush1.bf16.msra.mxu0 0
        %612 = vmatprep.subr.bf16.mxu0 0
        %613 = vmatpush1.bf16.msra.mxu0 0
        %614 = vmatprep.subr.bf16.mxu0 0
        %615 = vmatpush1.bf16.msra.mxu0 0
        %616 = vmatprep.subr.bf16.mxu0 0
        %617 = vmatpush1.bf16.msra.mxu0 0
        %618 = vmatprep.subr.bf16.mxu0 0
        %619 = vmatpush1.bf16.msra.mxu0 0
        %620 = vmatprep.subr.bf16.mxu0 0
        %621 = vmatpush1.bf16.msra.mxu0 0
        %622 = vmatprep.subr.bf16.mxu0 0
        %623 = vmatpush1.bf16.msra.mxu0 0
        %624 = vmatprep.subr.bf16.mxu0 0
        %625 = vmatpush1.bf16.msra.mxu0 0
        %626 = vmatprep.mubr.bf16.mxu0 0
        %627 = vmatmul.mubr.bf16.gmra.mrb[0].mxu0 %v521
        %v628 = vpop.f32.mrb[0].mxu0
        %v629 = vadd.f32 %v544, %v628
        %v630 = vpop.f32.mrb[0].mxu0
        %v631 = vpop.f32.mrb[0].mxu0
        %v632 = vadd.f32 %v544, %v631
        %v633 = vpop.f32.mrb[0].mxu0
        %634 = vmatprep.mubr.bf16.mxu0 0
        %635 = vmatmul.mubr.bf16.gmra.mrb[0].mxu0 %v522
        %v636 = vpop.f32.mrb[0].mxu0
        %v637 = vadd.f32 %v544, %v636
        %v638 = vpop.f32.mrb[0].mxu0
        %v639 = vpop.f32.mrb[0].mxu0
        %v640 = vadd.f32 %v544, %v639
        %v641 = vpop.f32.mrb[0].mxu0
        %642 = vdwg.mxu0
        %643 = vst [vmem:[%s295] sm:$0xff] %v629
        %644 = vst [vmem:[%s295 + $0x8] sm:$0xff] %v632
        %645 = vst [vmem:[%s295 + $0x10] sm:$0xff] %v637
        %646 = vst [vmem:[%s295 + $0x18] sm:$0xff] %v640
        %s647 = smul.u32 4, %s19
        %p648 = scmp.lt.s32.totalorder %s647, 7
        %s649 = scalar_select %p648, %s647, 7
        %s650 = smul.addr %s649, 8
        %s651 = scalar_lea.vmem %s7, %s650
        // Predicated region
        $region53: #{dnn_forward.1} parent=47 // pred_check
          %p652 = pneg %p189
        $region54: #{dnn_forward.1} parent=47 // pred_check_branch
          %654 = sbr.rel (%p652) target = $region56
        $region55: #{dnn_forward.1} parent=47 // pred_region
          %s655 = smul.u32 4, %s19
        $region56: #{dnn_forward.1} parent=47 // pred_fallthru
          _
      $region48: #{dnn_forward.1} parent=5 // pred_fallthru
        _
      %p656 = scmp.le.s32.totalorder 2, %s14
      // Predicated region
      $region57: #{dnn_forward.1} parent=5 // pred_check
        %p657 = pneg %p656
      $region58: #{dnn_forward.1} parent=5 // pred_check_branch
        %659 = sbr.rel (%p657) target = $region60
      $region59: #{dnn_forward.1} parent=5 // pred_region
        %s660 = ssub.s32 %s14, 2
        // Predicated region
        $region61: #{dnn_forward.1} parent=59 // pred_check
          %p661 = pneg %p195
        $region62: #{dnn_forward.1} parent=59 // pred_check_branch
          %663 = sbr.rel (%p661) target = $region64
        $region63: #{dnn_forward.1} parent=59 // pred_region
          %s664 = smul.u32 4, %s20
          %p665 = scmp.lt.s32.totalorder %s664, 7
          %s666 = scalar_select %p665, %s664, 7
          %s667 = smul.addr %s666, 8
          %s668 = scalar_lea.vmem %s7, %s667
        $region64: #{dnn_forward.1} parent=59 // pred_fallthru
          _
      $region60: #{dnn_forward.1} parent=5 // pred_fallthru
        _
    $region6: #{dnn_forward.1} parent=1 // loop_footer
      %s18 = sadd.s32 1, %s14
    $region7: #{dnn_forward.1} parent=1 // loop_footer_branch
      %13 = sbr.rel target = $region3
    $region8: #{dnn_forward.1} parent=1 // loop_exit
      _
    %669 = vsyncpa [#allocation3], 1
    %s670 = scalar_lea.sflag [#allocation3], 1
    %671 = vsyncpa %s670, 1

</llo_original>
